<compile_context>
chip_gen: v5e
topology: v5e:2x2
jax: 0.10.0
libtpu: 0.0.40
codegen_flags: <defaults>
</compile_context>

<pallas_src>
import functools

import jax
import jax.numpy as jnp
from jax import lax
from jax.experimental import pallas as pl
from jax.experimental.pallas import tpu as pltpu

IN_FEATURES = 256
OUT_FEATURES = 256
DROP_P = 0.1


def _linear_kernel(x_ref, w_ref, b_ref, o_ref, *, compute_dtype):
    # x_ref: (TM, K)   w_ref: (N, K) torch Linear layout   b_ref: (1, N)
    x = x_ref[...]
    w = w_ref[...]
    if compute_dtype is not None:
        x = x.astype(compute_dtype)
        w = w.astype(compute_dtype)
    # Contract x's last dim against w's last dim -> (TM, N); f32 accumulate.
    y = lax.dot_general(x, w, dimension_numbers=(((1,), (1,)), ((), ())),
                        preferred_element_type=jnp.float32)
    y = y + b_ref[...].astype(jnp.float32)
    o_ref[...] = y.astype(o_ref.dtype)


def _linear_dropout_kernel(x_ref, w_ref, b_ref, m_ref, o_ref, *, compute_dtype):
    # Same as _linear_kernel plus a fused inverted-dropout multiply.
    # m_ref holds 0.0 (dropped) or 1/(1-p) (kept), precomputed in the wrapper.
    x = x_ref[...]
    w = w_ref[...]
    if compute_dtype is not None:
        x = x.astype(compute_dtype)
        w = w.astype(compute_dtype)
    y = lax.dot_general(x, w, dimension_numbers=(((1,), (1,)), ((), ())),
                        preferred_element_type=jnp.float32)
    y = y + b_ref[...].astype(jnp.float32)
    y = y * m_ref[...].astype(jnp.float32)
    o_ref[...] = y.astype(o_ref.dtype)


def linear_dropout(x, weight, bias, *, training=False, p=DROP_P,
                   rng_key=None, row_blocks=1, compute_dtype=jnp.bfloat16):
    """Fused Linear(256->256, bias) + Dropout(p).

    x:      (B, S, IN) float32
    weight: (OUT, IN)  torch Linear layout, used as-is (no transpose)
    bias:   (OUT,)
    row_blocks: 1 (default) = single grid step; 2 to shard the parallel axis
        across v7x's two TensorCores.
    compute_dtype: MXU operand dtype (bf16 default, f32 accumulate);
        None keeps full f32 operands.
    """
    B, S, K = x.shape
    N, K_w = weight.shape
    assert K == K_w == IN_FEATURES

    x2d = x.reshape(B * S, K)
    M = x2d.shape[0]
    assert M % row_blocks == 0
    tm = M // row_blocks
    assert tm % 8 == 0, "row tile must stay sublane-aligned"

    b2d = bias.reshape(1, N)

    in_arrays = [x2d, weight, b2d]
    in_specs = [
        pl.BlockSpec((tm, K), lambda i: (i, 0)),   # x row tile
        pl.BlockSpec((N, K), lambda i: (0, 0)),    # full weight (OUT, IN)
        pl.BlockSpec((1, N), lambda i: (0, 0)),    # bias row
    ]

    if training:
        if rng_key is None:
            rng_key = jax.random.PRNGKey(0)
        # TODO(synk): on real hardware this mask could be drawn in-kernel with
        # pltpu.prng_random_bits; it is precomputed here so the kernel also
        # lowers under the CPU interpret harness (no TPU PRNG primitive there).
        keep = jax.random.bernoulli(rng_key, 1.0 - p, (M, N))
        scale = keep.astype(jnp.float32) * (1.0 / (1.0 - p))
        in_arrays.append(scale)
        in_specs.append(pl.BlockSpec((tm, N), lambda i: (i, 0)))
        kernel = functools.partial(_linear_dropout_kernel,
                                   compute_dtype=compute_dtype)
    else:
        kernel = functools.partial(_linear_kernel, compute_dtype=compute_dtype)

    out2d = pl.pallas_call(
        kernel,
        out_shape=jax.ShapeDtypeStruct((M, N), x.dtype),
        grid=(row_blocks,),
        in_specs=in_specs,
        out_specs=pl.BlockSpec((tm, N), lambda i: (i, 0)),
        compiler_params=pltpu.CompilerParams(
            dimension_semantics=("parallel",)),
    )(*in_arrays)

    return out2d.reshape(B, S, N)


if __name__ == "__main__":
    key = jax.random.PRNGKey(0)
    k_x, k_w, k_b, k_d = jax.random.split(key, 4)

    # Module shapes: input (1, 384, 256), Linear(256 -> 256).
    B, S = 1, 384
    x = jax.random.normal(k_x, (B, S, IN_FEATURES), dtype=jnp.float32)

    # Torch-Linear-style uniform init.
    bound = 1.0 / (IN_FEATURES ** 0.5)
    weight = jax.random.uniform(k_w, (OUT_FEATURES, IN_FEATURES),
                                minval=-bound, maxval=bound, dtype=jnp.float32)
    bias = jax.random.uniform(k_b, (OUT_FEATURES,),
                              minval=-bound, maxval=bound, dtype=jnp.float32)

    x2d = x.reshape(B * S, IN_FEATURES)

    # ---- eval mode, full-f32 path: strict check vs plain JAX ---------------
    out_f32 = jax.block_until_ready(
        linear_dropout(x, weight, bias, training=False, compute_dtype=None))
    ref_f32 = (x2d @ weight.T + bias).reshape(B, S, OUT_FEATURES)
    assert out_f32.shape == (B, S, OUT_FEATURES)
    assert jnp.allclose(out_f32, ref_f32, atol=1e-4, rtol=1e-4)

    # ---- eval mode, bf16-operand path (default, MXU-friendly) --------------
    out_bf16 = jax.block_until_ready(
        linear_dropout(x, weight, bias, training=False))
    ref_bf16 = (lax.dot_general(
        x2d.astype(jnp.bfloat16), weight.astype(jnp.bfloat16),
        dimension_numbers=(((1,), (1,)), ((), ())),
        preferred_element_type=jnp.float32) + bias
    ).reshape(B, S, OUT_FEATURES)
    assert jnp.allclose(out_bf16, ref_bf16, atol=2e-2, rtol=2e-2)

    # ---- training mode: fused inverted dropout -----------------------------
    out_train = jax.block_until_ready(
        linear_dropout(x, weight, bias, training=True, rng_key=k_d,
                       compute_dtype=None))
    keep = jax.random.bernoulli(k_d, 1.0 - DROP_P, (B * S, OUT_FEATURES))
    scale = keep.astype(jnp.float32) / (1.0 - DROP_P)
    ref_train = (ref_f32.reshape(B * S, OUT_FEATURES) * scale
                 ).reshape(B, S, OUT_FEATURES)
    assert out_train.shape == (B, S, OUT_FEATURES)
    assert jnp.allclose(out_train, ref_train, atol=1e-4, rtol=1e-4)

    print("KERNEL_OK")
</pallas_src>

<mosaic_0001>
module attributes {stable_mosaic.version = 11 : i64} {
  func.func @_linear_kernel(%arg0: i32, %arg1: memref<384x256xf32, #tpu.memory_space<vmem>>, %arg2: memref<256x256xf32, #tpu.memory_space<vmem>>, %arg3: memref<1x256xf32, #tpu.memory_space<vmem>>, %arg4: memref<384x256xf32, #tpu.memory_space<vmem>>) attributes {dimension_semantics = [#tpu.dimension_semantics<parallel>], iteration_bounds = array<i64: 1>, scalar_prefetch = 0 : i64, scratch_operands = 0 : i64, tpu.core_type = #tpu.core_type<tc>, window_params = [{transform_indices = @transform_0, window_bounds = array<i64: 384, 256>}, {pipeline_mode = #tpu.pipeline_mode<synchronous>, transform_indices = @transform_1, window_bounds = array<i64: 256, 256>}, {pipeline_mode = #tpu.pipeline_mode<synchronous>, transform_indices = @transform_2, window_bounds = array<i64: 1, 256>}, {transform_indices = @transform_3, window_bounds = array<i64: 384, 256>}]} {
    %c0 = arith.constant 0 : index
    %c0_0 = arith.constant 0 : index
    %0 = vector.load %arg1[%c0, %c0_0] : memref<384x256xf32, #tpu.memory_space<vmem>>, vector<384x256xf32>
    %c0_1 = arith.constant 0 : index
    %c0_2 = arith.constant 0 : index
    %1 = vector.load %arg2[%c0_1, %c0_2] : memref<256x256xf32, #tpu.memory_space<vmem>>, vector<256x256xf32>
    %cst = arith.constant dense<0.000000e+00> : vector<384x256xf32>
    %2 = tpu.matmul %0, %1, %cst {dimension_numbers = #tpu.dot_dimension_numbers<[1], [1], [0], [0], [0, 0, 1, 0], [], []>} : vector<384x256xf32>, vector<256x256xf32>, vector<384x256xf32> -> vector<384x256xf32>
    %c0_3 = arith.constant 0 : index
    %c0_4 = arith.constant 0 : index
    %3 = vector.load %arg3[%c0_3, %c0_4] : memref<1x256xf32, #tpu.memory_space<vmem>>, vector<1x256xf32>
    %4 = vector.broadcast %3 : vector<1x256xf32> to vector<384x256xf32>
    %5 = arith.addf %2, %4 : vector<384x256xf32>
    %c0_5 = arith.constant 0 : index
    %c0_6 = arith.constant 0 : index
    %6 = vector.load %arg4[%c0_5, %c0_6] : memref<384x256xf32, #tpu.memory_space<vmem>>, vector<384x256xf32>
    tpu.vector_store %arg4[%c0_5, %c0_6], %5 {strides = array<i32>} : memref<384x256xf32, #tpu.memory_space<vmem>>, vector<384x256xf32>,
    return
  }
  func.func @transform_0(%arg0: i32) -> (i32, i32) {
    %c0_i32 = arith.constant 0 : i32
    %c0_i32_0 = arith.constant 0 : i32
    return %arg0, %c0_i32 : i32, i32
  }
  func.func @transform_1(%arg0: i32) -> (i32, i32) {
    %c0_i32 = arith.constant 0 : i32
    %c0_i32_0 = arith.constant 0 : i32
    %c0_i32_1 = arith.constant 0 : i32
    return %c0_i32, %c0_i32_0 : i32, i32
  }
  func.func @transform_2(%arg0: i32) -> (i32, i32) {
    %c0_i32 = arith.constant 0 : i32
    %c0_i32_0 = arith.constant 0 : i32
    %c0_i32_1 = arith.constant 0 : i32
    return %c0_i32, %c0_i32_0 : i32, i32
  }
  func.func @transform_3(%arg0: i32) -> (i32, i32) {
    %c0_i32 = arith.constant 0 : i32
    %c0_i32_0 = arith.constant 0 : i32
    return %arg0, %c0_i32 : i32, i32
  }
}

</mosaic_0001>

<llo_original>
// kernel: tpu_custom_call.1
$region0: #{tpu_custom_call.1}
  #allocation0 [shape = 'u32[]', space=smem, size = 0x4, offset = 0x4, fixed_abs, tag = 'smem constant byte address 0x4 - core index']
  #allocation1 [shape = 'u32[72,128]{1,0:T(1,128)}', space=vmem, size = 0x9000, scoped, tag = 'internal scratch']
  %s0 = inlined_call_operand.hbm [shape: f32[384,256], index: 0, kind: input, shape index: {}]
  %s1 = inlined_call_operand.hbm [shape: f32[256,256], index: 1, kind: input, shape index: {}]
  %s2 = inlined_call_operand.hbm [shape: f32[1,256], index: 2, kind: input, shape index: {}]
  %s3 = inlined_call_operand.hbm [shape: f32[384,256], index: 3, kind: output, shape index: {}]
  %s4 = sld [smem:[#allocation0]]
  $region34: #{tpu_custom_call.1} parent=0
    _
  %s6 = ssub.s32 1, %s4
  %s7 = scalar_select 0, %s6, %s4
  $region1: #{tpu_custom_call.1} parent=0
    #allocation2 [shape = 'u8[393216]{0}', space=vmem, size = 0x60000, scoped, tag = 'input window, operand 0, single buffered']
    #allocation3 [shape = 's32[1]{0}', space=sflag, size = 0x4, scoped, tag = 'scoped memory for tpu_custom_call.1']
    #allocation4 [shape = 's32[1]{0}', space=sflag, size = 0x4, scoped, tag = 'scoped memory for tpu_custom_call.1']
    #allocation5 [shape = 'u8[262144]{0}', space=vmem, size = 0x40000, scoped, tag = 'input window, operand 1, single buffered']
    #allocation6 [shape = 's32[1]{0}', space=sflag, size = 0x4, scoped, tag = 'scoped memory for tpu_custom_call.1']
    #allocation7 [shape = 'u8[1024]{0}', space=vmem, size = 0x400, scoped, tag = 'input window, operand 2, single buffered']
    #allocation8 [shape = 'u8[393216]{0}', space=vmem, size = 0x60000, scoped, tag = 'output window, operand 0, single buffered']
    %8 = vsyncpa [#allocation3], 0
    %9 = vsyncpa [#allocation6], 0
    %10 = vsyncpa [#allocation4], 0
    // Predicated region
    $region2: #{tpu_custom_call.1} parent=1 // pred_check
      _
    $region3: #{tpu_custom_call.1} parent=1 // pred_check_branch
      %12 = sbr.rel (0) target = $region5
    $region4: #{tpu_custom_call.1} parent=1 // pred_region
      %14 = vsyncadd [#allocation3], 0
      %s15 = sshll.u32 %s0, 4
      %s16 = int_to_ptr.hbm [resolvable:$true] %s15
      %s17 = sshll.u32 [#allocation2], 4
      %s18 = int_to_ptr.vmem [resolvable:$true] %s17
      %23 = dma.hbm_to_vmem [thread:$0]  %s16, 12288, %s18, [#allocation3], 256, 256, 16
    $region5: #{tpu_custom_call.1} parent=1 // pred_fallthru
      _
    // Predicated region
    $region6: #{tpu_custom_call.1} parent=1 // pred_check
      _
    $region7: #{tpu_custom_call.1} parent=1 // pred_check_branch
      %25 = sbr.rel (0) target = $region9
    $region8: #{tpu_custom_call.1} parent=1 // pred_region
      %27 = vsyncadd [#allocation6], 0
      %s28 = sshll.u32 %s1, 4
      %s29 = int_to_ptr.hbm [resolvable:$true] %s28
      %s30 = sshll.u32 [#allocation5], 4
      %s31 = int_to_ptr.vmem [resolvable:$true] %s30
      %36 = dma.hbm_to_vmem [thread:$0]  %s29, 8192, %s31, [#allocation6], 256, 256, 16
    $region9: #{tpu_custom_call.1} parent=1 // pred_fallthru
      _
    // Predicated region
    $region10: #{tpu_custom_call.1} parent=1 // pred_check
      _
    $region11: #{tpu_custom_call.1} parent=1 // pred_check_branch
      %38 = sbr.rel (0) target = $region13
    $region12: #{tpu_custom_call.1} parent=1 // pred_region
      %40 = vsyncadd [#allocation6], 0
      %s42 = sshll.u32 %s2, 4
      %s43 = int_to_ptr.hbm [resolvable:$true] %s42
      %s44 = sshll.u32 [#allocation7], 4
      %s45 = int_to_ptr.vmem [resolvable:$true] %s44
      %47 = dma.hbm_to_vmem [thread:$0]  %s43, 32, %s45, [#allocation6]
    $region13: #{tpu_custom_call.1} parent=1 // pred_fallthru
      _
    // Predicated region
    $region14: #{tpu_custom_call.1} parent=1 // pred_check
      _
    $region15: #{tpu_custom_call.1} parent=1 // pred_check_branch
      %49 = sbr.rel (0) target = $region17
    $region16: #{tpu_custom_call.1} parent=1 // pred_region
      %51 = dma.done [#allocation3], 12288
    $region17: #{tpu_custom_call.1} parent=1 // pred_fallthru
      _
    // Predicated region
    $region18: #{tpu_custom_call.1} parent=1 // pred_check
      _
    $region19: #{tpu_custom_call.1} parent=1 // pred_check_branch
      %53 = sbr.rel (0) target = $region21
    $region20: #{tpu_custom_call.1} parent=1 // pred_region
      %55 = dma.done [#allocation6], 8192
    $region21: #{tpu_custom_call.1} parent=1 // pred_fallthru
      _
    // Predicated region
    $region22: #{tpu_custom_call.1} parent=1 // pred_check
      _
    $region23: #{tpu_custom_call.1} parent=1 // pred_check_branch
      %57 = sbr.rel (0) target = $region25
    $region24: #{tpu_custom_call.1} parent=1 // pred_region
      %59 = dma.done [#allocation6], 32
    $region25: #{tpu_custom_call.1} parent=1 // pred_fallthru
      _
    %v60 = vld [vmem:[#allocation2] sm:$0xff]
    %v61 = vld [vmem:[#allocation2 + $0x8] sm:$0xff]
    %v62 = vld [vmem:[#allocation2 + $0x10] sm:$0xff]
    %v63 = vld [vmem:[#allocation2 + $0x18] sm:$0xff]
    %v64 = vld [vmem:[#allocation2 + $0x20] sm:$0xff]
    %v65 = vld [vmem:[#allocation2 + $0x28] sm:$0xff]
    %v66 = vld [vmem:[#allocation2 + $0x30] sm:$0xff]
    %v67 = vld [vmem:[#allocation2 + $0x38] sm:$0xff]
    %v68 = vld [vmem:[#allocation2 + $0x40] sm:$0xff]
    %v69 = vld [vmem:[#allocation2 + $0x48] sm:$0xff]
    %v70 = vld [vmem:[#allocation2 + $0x50] sm:$0xff]
    %v71 = vld [vmem:[#allocation2 + $0x58] sm:$0xff]
    %v72 = vld [vmem:[#allocation2 + $0x60] sm:$0xff]
    %v73 = vld [vmem:[#allocation2 + $0x68] sm:$0xff]
    %v74 = vld [vmem:[#allocation2 + $0x70] sm:$0xff]
    %v75 = vld [vmem:[#allocation2 + $0x78] sm:$0xff]
    %v76 = vld [vmem:[#allocation2 + $0x80] sm:$0xff]
    %v77 = vld [vmem:[#allocation2 + $0x88] sm:$0xff]
    %v78 = vld [vmem:[#allocation2 + $0x90] sm:$0xff]
    %v79 = vld [vmem:[#allocation2 + $0x98] sm:$0xff]
    %v80 = vld [vmem:[#allocation2 + $0xa0] sm:$0xff]
    %v81 = vld [vmem:[#allocation2 + $0xa8] sm:$0xff]
    %v82 = vld [vmem:[#allocation2 + $0xb0] sm:$0xff]
    %v83 = vld [vmem:[#allocation2 + $0xb8] sm:$0xff]
    %v84 = vld [vmem:[#allocation2 + $0xc0] sm:$0xff]
    %v85 = vld [vmem:[#allocation2 + $0xc8] sm:$0xff]
    %v86 = vld [vmem:[#allocation2 + $0xd0] sm:$0xff]
    %v87 = vld [vmem:[#allocation2 + $0xd8] sm:$0xff]
    %v88 = vld [vmem:[#allocation2 + $0xe0] sm:$0xff]
    %v89 = vld [vmem:[#allocation2 + $0xe8] sm:$0xff]
    %v90 = vld [vmem:[#allocation2 + $0xf0] sm:$0xff]
    %v91 = vld [vmem:[#allocation2 + $0xf8] sm:$0xff]
    %v92 = vld [vmem:[#allocation2 + $0x100] sm:$0xff]
    %v93 = vld [vmem:[#allocation2 + $0x108] sm:$0xff]
    %v94 = vld [vmem:[#allocation2 + $0x110] sm:$0xff]
    %v95 = vld [vmem:[#allocation2 + $0x118] sm:$0xff]
    %v96 = vld [vmem:[#allocation2 + $0x120] sm:$0xff]
    %v97 = vld [vmem:[#allocation2 + $0x128] sm:$0xff]
    %v98 = vld [vmem:[#allocation2 + $0x130] sm:$0xff]
    %v99 = vld [vmem:[#allocation2 + $0x138] sm:$0xff]
    %v100 = vld [vmem:[#allocation2 + $0x140] sm:$0xff]
    %v101 = vld [vmem:[#allocation2 + $0x148] sm:$0xff]
    %v102 = vld [vmem:[#allocation2 + $0x150] sm:$0xff]
    %v103 = vld [vmem:[#allocation2 + $0x158] sm:$0xff]
    %v104 = vld [vmem:[#allocation2 + $0x160] sm:$0xff]
    %v105 = vld [vmem:[#allocation2 + $0x168] sm:$0xff]
    %v106 = vld [vmem:[#allocation2 + $0x170] sm:$0xff]
    %v107 = vld [vmem:[#allocation2 + $0x178] sm:$0xff]
    %v108 = vld [vmem:[#allocation2 + $0x180] sm:$0xff]
    %v109 = vld [vmem:[#allocation2 + $0x188] sm:$0xff]
    %v110 = vld [vmem:[#allocation2 + $0x190] sm:$0xff]
    %v111 = vld [vmem:[#allocation2 + $0x198] sm:$0xff]
    %v112 = vld [vmem:[#allocation2 + $0x1a0] sm:$0xff]
    %v113 = vld [vmem:[#allocation2 + $0x1a8] sm:$0xff]
    %v114 = vld [vmem:[#allocation2 + $0x1b0] sm:$0xff]
    %v115 = vld [vmem:[#allocation2 + $0x1b8] sm:$0xff]
    %v116 = vld [vmem:[#allocation2 + $0x1c0] sm:$0xff]
    %v117 = vld [vmem:[#allocation2 + $0x1c8] sm:$0xff]
    %v118 = vld [vmem:[#allocation2 + $0x1d0] sm:$0xff]
    %v119 = vld [vmem:[#allocation2 + $0x1d8] sm:$0xff]
    %v120 = vld [vmem:[#allocation2 + $0x1e0] sm:$0xff]
    %v121 = vld [vmem:[#allocation2 + $0x1e8] sm:$0xff]
    %v122 = vld [vmem:[#allocation2 + $0x1f0] sm:$0xff]
    %v123 = vld [vmem:[#allocation2 + $0x1f8] sm:$0xff]
    %v124 = vld [vmem:[#allocation2 + $0x200] sm:$0xff]
    %v125 = vld [vmem:[#allocation2 + $0x208] sm:$0xff]
    %v126 = vld [vmem:[#allocation2 + $0x210] sm:$0xff]
    %v127 = vld [vmem:[#allocation2 + $0x218] sm:$0xff]
    %v128 = vld [vmem:[#allocation2 + $0x220] sm:$0xff]
    %v129 = vld [vmem:[#allocation2 + $0x228] sm:$0xff]
    %v130 = vld [vmem:[#allocation2 + $0x230] sm:$0xff]
    %v131 = vld [vmem:[#allocation2 + $0x238] sm:$0xff]
    %v132 = vld [vmem:[#allocation2 + $0x240] sm:$0xff]
    %v133 = vld [vmem:[#allocation2 + $0x248] sm:$0xff]
    %v134 = vld [vmem:[#allocation2 + $0x250] sm:$0xff]
    %v135 = vld [vmem:[#allocation2 + $0x258] sm:$0xff]
    %v136 = vld [vmem:[#allocation2 + $0x260] sm:$0xff]
    %v137 = vld [vmem:[#allocation2 + $0x268] sm:$0xff]
    %v138 = vld [vmem:[#allocation2 + $0x270] sm:$0xff]
    %v139 = vld [vmem:[#allocation2 + $0x278] sm:$0xff]
    %v140 = vld [vmem:[#allocation2 + $0x280] sm:$0xff]
    %v141 = vld [vmem:[#allocation2 + $0x288] sm:$0xff]
    %v142 = vld [vmem:[#allocation2 + $0x290] sm:$0xff]
    %v143 = vld [vmem:[#allocation2 + $0x298] sm:$0xff]
    %v144 = vld [vmem:[#allocation2 + $0x2a0] sm:$0xff]
    %v145 = vld [vmem:[#allocation2 + $0x2a8] sm:$0xff]
    %v146 = vld [vmem:[#allocation2 + $0x2b0] sm:$0xff]
    %v147 = vld [vmem:[#allocation2 + $0x2b8] sm:$0xff]
    %v148 = vld [vmem:[#allocation2 + $0x2c0] sm:$0xff]
    %v149 = vld [vmem:[#allocation2 + $0x2c8] sm:$0xff]
    %v150 = vld [vmem:[#allocation2 + $0x2d0] sm:$0xff]
    %v151 = vld [vmem:[#allocation2 + $0x2d8] sm:$0xff]
    %v152 = vld [vmem:[#allocation2 + $0x2e0] sm:$0xff]
    %v153 = vld [vmem:[#allocation2 + $0x2e8] sm:$0xff]
    %v154 = vld [vmem:[#allocation2 + $0x2f0] sm:$0xff]
    %v155 = vld [vmem:[#allocation2 + $0x2f8] sm:$0xff]
    %v156 = vld [vmem:[#allocation5] sm:$0xff]
    %v157 = vld [vmem:[#allocation5 + $0x8] sm:$0xff]
    %v158 = vld [vmem:[#allocation5 + $0x10] sm:$0xff]
    %v159 = vld [vmem:[#allocation5 + $0x18] sm:$0xff]
    %v160 = vld [vmem:[#allocation5 + $0x20] sm:$0xff]
    %v161 = vld [vmem:[#allocation5 + $0x28] sm:$0xff]
    %v162 = vld [vmem:[#allocation5 + $0x30] sm:$0xff]
    %v163 = vld [vmem:[#allocation5 + $0x38] sm:$0xff]
    %v164 = vld [vmem:[#allocation5 + $0x40] sm:$0xff]
    %v165 = vld [vmem:[#allocation5 + $0x48] sm:$0xff]
    %v166 = vld [vmem:[#allocation5 + $0x50] sm:$0xff]
    %v167 = vld [vmem:[#allocation5 + $0x58] sm:$0xff]
    %v168 = vld [vmem:[#allocation5 + $0x60] sm:$0xff]
    %v169 = vld [vmem:[#allocation5 + $0x68] sm:$0xff]
    %v170 = vld [vmem:[#allocation5 + $0x70] sm:$0xff]
    %v171 = vld [vmem:[#allocation5 + $0x78] sm:$0xff]
    %v172 = vld [vmem:[#allocation5 + $0x80] sm:$0xff]
    %v173 = vld [vmem:[#allocation5 + $0x88] sm:$0xff]
    %v174 = vld [vmem:[#allocation5 + $0x90] sm:$0xff]
    %v175 = vld [vmem:[#allocation5 + $0x98] sm:$0xff]
    %v176 = vld [vmem:[#allocation5 + $0xa0] sm:$0xff]
    %v177 = vld [vmem:[#allocation5 + $0xa8] sm:$0xff]
    %v178 = vld [vmem:[#allocation5 + $0xb0] sm:$0xff]
    %v179 = vld [vmem:[#allocation5 + $0xb8] sm:$0xff]
    %v180 = vld [vmem:[#allocation5 + $0xc0] sm:$0xff]
    %v181 = vld [vmem:[#allocation5 + $0xc8] sm:$0xff]
    %v182 = vld [vmem:[#allocation5 + $0xd0] sm:$0xff]
    %v183 = vld [vmem:[#allocation5 + $0xd8] sm:$0xff]
    %v184 = vld [vmem:[#allocation5 + $0xe0] sm:$0xff]
    %v185 = vld [vmem:[#allocation5 + $0xe8] sm:$0xff]
    %v186 = vld [vmem:[#allocation5 + $0xf0] sm:$0xff]
    %v187 = vld [vmem:[#allocation5 + $0xf8] sm:$0xff]
    %v188 = vld [vmem:[#allocation5 + $0x100] sm:$0xff]
    %v189 = vld [vmem:[#allocation5 + $0x108] sm:$0xff]
    %v190 = vld [vmem:[#allocation5 + $0x110] sm:$0xff]
    %v191 = vld [vmem:[#allocation5 + $0x118] sm:$0xff]
    %v192 = vld [vmem:[#allocation5 + $0x120] sm:$0xff]
    %v193 = vld [vmem:[#allocation5 + $0x128] sm:$0xff]
    %v194 = vld [vmem:[#allocation5 + $0x130] sm:$0xff]
    %v195 = vld [vmem:[#allocation5 + $0x138] sm:$0xff]
    %v196 = vld [vmem:[#allocation5 + $0x140] sm:$0xff]
    %v197 = vld [vmem:[#allocation5 + $0x148] sm:$0xff]
    %v198 = vld [vmem:[#allocation5 + $0x150] sm:$0xff]
    %v199 = vld [vmem:[#allocation5 + $0x158] sm:$0xff]
    %v200 = vld [vmem:[#allocation5 + $0x160] sm:$0xff]
    %v201 = vld [vmem:[#allocation5 + $0x168] sm:$0xff]
    %v202 = vld [vmem:[#allocation5 + $0x170] sm:$0xff]
    %v203 = vld [vmem:[#allocation5 + $0x178] sm:$0xff]
    %v204 = vld [vmem:[#allocation5 + $0x180] sm:$0xff]
    %v205 = vld [vmem:[#allocation5 + $0x188] sm:$0xff]
    %v206 = vld [vmem:[#allocation5 + $0x190] sm:$0xff]
    %v207 = vld [vmem:[#allocation5 + $0x198] sm:$0xff]
    %v208 = vld [vmem:[#allocation5 + $0x1a0] sm:$0xff]
    %v209 = vld [vmem:[#allocation5 + $0x1a8] sm:$0xff]
    %v210 = vld [vmem:[#allocation5 + $0x1b0] sm:$0xff]
    %v211 = vld [vmem:[#allocation5 + $0x1b8] sm:$0xff]
    %v212 = vld [vmem:[#allocation5 + $0x1c0] sm:$0xff]
    %v213 = vld [vmem:[#allocation5 + $0x1c8] sm:$0xff]
    %v214 = vld [vmem:[#allocation5 + $0x1d0] sm:$0xff]
    %v215 = vld [vmem:[#allocation5 + $0x1d8] sm:$0xff]
    %v216 = vld [vmem:[#allocation5 + $0x1e0] sm:$0xff]
    %v217 = vld [vmem:[#allocation5 + $0x1e8] sm:$0xff]
    %v218 = vld [vmem:[#allocation5 + $0x1f0] sm:$0xff]
    %v219 = vld [vmem:[#allocation5 + $0x1f8] sm:$0xff]
    %v220 = vld [vmem:[#allocation7] sm:$0x3]
    %v222 = vperm.slane %v220, 0
    %v223 = vperm.slane %v220, 1
    %226 = vmatpush.xpose.msra.mxu0 %v186
    %227 = vmatpush.xpose.msra.mxu0 %v184
    %228 = vmatpush.xpose.msra.mxu0 %v182
    %229 = vmatpush.xpose.msra.mxu0 %v180
    %230 = vmatpush.xpose.msra.mxu0 %v178
    %231 = vmatpush.xpose.msra.mxu0 %v176
    %232 = vmatpush.xpose.msra.mxu0 %v174
    %233 = vmatpush.xpose.msra.mxu0 %v172
    %234 = vmatpush.xpose.msra.mxu0 %v170
    %235 = vmatpush.xpose.msra.mxu0 %v168
    %236 = vmatpush.xpose.msra.mxu0 %v166
    %237 = vmatpush.xpose.msra.mxu0 %v164
    %238 = vmatpush.xpose.msra.mxu0 %v162
    %239 = vmatpush.xpose.msra.mxu0 %v160
    %240 = vmatpush.xpose.msra.mxu0 %v158
    %241 = vmatpush.xpose.msra.mxu0 %v156
    %242 = vmatmul.f32.gmra.mxu0 %v60
    %v243 = vpop.f32.mrf.mxu0
    %v244 = vadd.f32 %v222, %v243
    %245 = vmatmul.f32.gmra.mxu0 %v62
    %v246 = vpop.f32.mrf.mxu0
    %v247 = vadd.f32 %v222, %v246
    %248 = vmatmul.f32.gmra.mxu0 %v64
    %v249 = vpop.f32.mrf.mxu0
    %v250 = vadd.f32 %v222, %v249
    %251 = vmatmul.f32.gmra.mxu0 %v66
    %v252 = vpop.f32.mrf.mxu0
    %v253 = vadd.f32 %v222, %v252
    %254 = vmatmul.f32.gmra.mxu0 %v68
    %v255 = vpop.f32.mrf.mxu0
    %v256 = vadd.f32 %v222, %v255
    %257 = vmatmul.f32.gmra.mxu0 %v70
    %v258 = vpop.f32.mrf.mxu0
    %v259 = vadd.f32 %v222, %v258
    %260 = vmatmul.f32.gmra.mxu0 %v72
    %v261 = vpop.f32.mrf.mxu0
    %v262 = vadd.f32 %v222, %v261
    %263 = vmatmul.f32.gmra.mxu0 %v74
    %v264 = vpop.f32.mrf.mxu0
    %v265 = vadd.f32 %v222, %v264
    %266 = vmatmul.f32.gmra.mxu0 %v76
    %v267 = vpop.f32.mrf.mxu0
    %v268 = vadd.f32 %v222, %v267
    %269 = vmatmul.f32.gmra.mxu0 %v78
    %v270 = vpop.f32.mrf.mxu0
    %v271 = vadd.f32 %v222, %v270
    %272 = vmatmul.f32.gmra.mxu0 %v80
    %v273 = vpop.f32.mrf.mxu0
    %v274 = vadd.f32 %v222, %v273
    %275 = vmatmul.f32.gmra.mxu0 %v82
    %v276 = vpop.f32.mrf.mxu0
    %v277 = vadd.f32 %v222, %v276
    %278 = vmatmul.f32.gmra.mxu0 %v84
    %v279 = vpop.f32.mrf.mxu0
    %v280 = vadd.f32 %v222, %v279
    %281 = vmatmul.f32.gmra.mxu0 %v86
    %v282 = vpop.f32.mrf.mxu0
    %v283 = vadd.f32 %v222, %v282
    %284 = vmatmul.f32.gmra.mxu0 %v88
    %v285 = vpop.f32.mrf.mxu0
    %v286 = vadd.f32 %v222, %v285
    %287 = vmatmul.f32.gmra.mxu0 %v90
    %v288 = vpop.f32.mrf.mxu0
    %v289 = vadd.f32 %v222, %v288
    %290 = vmatmul.f32.gmra.mxu0 %v92
    %v291 = vpop.f32.mrf.mxu0
    %v292 = vadd.f32 %v222, %v291
    %293 = vmatmul.f32.gmra.mxu0 %v94
    %v294 = vpop.f32.mrf.mxu0
    %v295 = vadd.f32 %v222, %v294
    %296 = vmatmul.f32.gmra.mxu0 %v96
    %v297 = vpop.f32.mrf.mxu0
    %v298 = vadd.f32 %v222, %v297
    %299 = vmatmul.f32.gmra.mxu0 %v98
    %v300 = vpop.f32.mrf.mxu0
    %v301 = vadd.f32 %v222, %v300
    %302 = vmatmul.f32.gmra.mxu0 %v100
    %v303 = vpop.f32.mrf.mxu0
    %v304 = vadd.f32 %v222, %v303
    %305 = vmatmul.f32.gmra.mxu0 %v102
    %v306 = vpop.f32.mrf.mxu0
    %v307 = vadd.f32 %v222, %v306
    %308 = vmatmul.f32.gmra.mxu0 %v104
    %v309 = vpop.f32.mrf.mxu0
    %v310 = vadd.f32 %v222, %v309
    %311 = vmatmul.f32.gmra.mxu0 %v106
    %v312 = vpop.f32.mrf.mxu0
    %v313 = vadd.f32 %v222, %v312
    %314 = vmatmul.f32.gmra.mxu0 %v108
    %v315 = vpop.f32.mrf.mxu0
    %v316 = vadd.f32 %v222, %v315
    %317 = vmatmul.f32.gmra.mxu0 %v110
    %v318 = vpop.f32.mrf.mxu0
    %v319 = vadd.f32 %v222, %v318
    %320 = vmatmul.f32.gmra.mxu0 %v112
    %v321 = vpop.f32.mrf.mxu0
    %v322 = vadd.f32 %v222, %v321
    %323 = vmatmul.f32.gmra.mxu0 %v114
    %v324 = vpop.f32.mrf.mxu0
    %v325 = vadd.f32 %v222, %v324
    %326 = vmatmul.f32.gmra.mxu0 %v116
    %v327 = vpop.f32.mrf.mxu0
    %v328 = vadd.f32 %v222, %v327
    %329 = vmatmul.f32.gmra.mxu0 %v118
    %v330 = vpop.f32.mrf.mxu0
    %v331 = vadd.f32 %v222, %v330
    %332 = vmatmul.f32.gmra.mxu0 %v120
    %v333 = vpop.f32.mrf.mxu0
    %v334 = vadd.f32 %v222, %v333
    %335 = vmatmul.f32.gmra.mxu0 %v122
    %v336 = vpop.f32.mrf.mxu0
    %v337 = vadd.f32 %v222, %v336
    %338 = vmatmul.f32.gmra.mxu0 %v124
    %v339 = vpop.f32.mrf.mxu0
    %v340 = vadd.f32 %v222, %v339
    %341 = vmatmul.f32.gmra.mxu0 %v126
    %v342 = vpop.f32.mrf.mxu0
    %v343 = vadd.f32 %v222, %v342
    %344 = vmatmul.f32.gmra.mxu0 %v128
    %v345 = vpop.f32.mrf.mxu0
    %v346 = vadd.f32 %v222, %v345
    %347 = vmatmul.f32.gmra.mxu0 %v130
    %v348 = vpop.f32.mrf.mxu0
    %v349 = vadd.f32 %v222, %v348
    %350 = vmatmul.f32.gmra.mxu0 %v132
    %v351 = vpop.f32.mrf.mxu0
    %v352 = vadd.f32 %v222, %v351
    %353 = vmatmul.f32.gmra.mxu0 %v134
    %v354 = vpop.f32.mrf.mxu0
    %v355 = vadd.f32 %v222, %v354
    %356 = vmatmul.f32.gmra.mxu0 %v136
    %v357 = vpop.f32.mrf.mxu0
    %v358 = vadd.f32 %v222, %v357
    %359 = vmatmul.f32.gmra.mxu0 %v138
    %v360 = vpop.f32.mrf.mxu0
    %v361 = vadd.f32 %v222, %v360
    %362 = vmatmul.f32.gmra.mxu0 %v140
    %v363 = vpop.f32.mrf.mxu0
    %v364 = vadd.f32 %v222, %v363
    %365 = vmatmul.f32.gmra.mxu0 %v142
    %v366 = vpop.f32.mrf.mxu0
    %v367 = vadd.f32 %v222, %v366
    %368 = vmatmul.f32.gmra.mxu0 %v144
    %v369 = vpop.f32.mrf.mxu0
    %v370 = vadd.f32 %v222, %v369
    %371 = vmatmul.f32.gmra.mxu0 %v146
    %v372 = vpop.f32.mrf.mxu0
    %v373 = vadd.f32 %v222, %v372
    %374 = vmatmul.f32.gmra.mxu0 %v148
    %v375 = vpop.f32.mrf.mxu0
    %v376 = vadd.f32 %v222, %v375
    %377 = vmatmul.f32.gmra.mxu0 %v150
    %v378 = vpop.f32.mrf.mxu0
    %v379 = vadd.f32 %v222, %v378
    %380 = vmatmul.f32.gmra.mxu0 %v152
    %v381 = vpop.f32.mrf.mxu0
    %v382 = vadd.f32 %v222, %v381
    %383 = vmatmul.f32.gmra.mxu0 %v154
    %v384 = vpop.f32.mrf.mxu0
    %v385 = vadd.f32 %v222, %v384
    %386 = vdwg.mxu0
    %387 = vmatpush.xpose.msra.mxu0 %v187
    %388 = vmatpush.xpose.msra.mxu0 %v185
    %389 = vmatpush.xpose.msra.mxu0 %v183
    %390 = vmatpush.xpose.msra.mxu0 %v181
    %391 = vmatpush.xpose.msra.mxu0 %v179
    %392 = vmatpush.xpose.msra.mxu0 %v177
    %393 = vmatpush.xpose.msra.mxu0 %v175
    %394 = vmatpush.xpose.msra.mxu0 %v173
    %395 = vmatpush.xpose.msra.mxu0 %v171
    %396 = vmatpush.xpose.msra.mxu0 %v169
    %397 = vmatpush.xpose.msra.mxu0 %v167
    %398 = vmatpush.xpose.msra.mxu0 %v165
    %399 = vmatpush.xpose.msra.mxu0 %v163
    %400 = vmatpush.xpose.msra.mxu0 %v161
    %401 = vmatpush.xpose.msra.mxu0 %v159
    %402 = vmatpush.xpose.msra.mxu0 %v157
    %403 = vmatmul.f32.gmra.mxu0 %v61
    %v404 = vpop.f32.mrf.mxu0
    %v405 = vadd.f32 %v244, %v404
    %406 = vmatmul.f32.gmra.mxu0 %v63
    %v407 = vpop.f32.mrf.mxu0
    %v408 = vadd.f32 %v247, %v407
    %409 = vmatmul.f32.gmra.mxu0 %v65
    %v410 = vpop.f32.mrf.mxu0
    %v411 = vadd.f32 %v250, %v410
    %412 = vmatmul.f32.gmra.mxu0 %v67
    %v413 = vpop.f32.mrf.mxu0
    %v414 = vadd.f32 %v253, %v413
    %415 = vmatmul.f32.gmra.mxu0 %v69
    %v416 = vpop.f32.mrf.mxu0
    %v417 = vadd.f32 %v256, %v416
    %418 = vmatmul.f32.gmra.mxu0 %v71
    %v419 = vpop.f32.mrf.mxu0
    %v420 = vadd.f32 %v259, %v419
    %421 = vmatmul.f32.gmra.mxu0 %v73
    %v422 = vpop.f32.mrf.mxu0
    %v423 = vadd.f32 %v262, %v422
    %424 = vmatmul.f32.gmra.mxu0 %v75
    %v425 = vpop.f32.mrf.mxu0
    %v426 = vadd.f32 %v265, %v425
    %427 = vmatmul.f32.gmra.mxu0 %v77
    %v428 = vpop.f32.mrf.mxu0
    %v429 = vadd.f32 %v268, %v428
    %430 = vmatmul.f32.gmra.mxu0 %v79
    %v431 = vpop.f32.mrf.mxu0
    %v432 = vadd.f32 %v271, %v431
    %433 = vmatmul.f32.gmra.mxu0 %v81
    %v434 = vpop.f32.mrf.mxu0
    %v435 = vadd.f32 %v274, %v434
    %436 = vmatmul.f32.gmra.mxu0 %v83
    %v437 = vpop.f32.mrf.mxu0
    %v438 = vadd.f32 %v277, %v437
    %439 = vmatmul.f32.gmra.mxu0 %v85
    %v440 = vpop.f32.mrf.mxu0
    %v441 = vadd.f32 %v280, %v440
    %442 = vmatmul.f32.gmra.mxu0 %v87
    %v443 = vpop.f32.mrf.mxu0
    %v444 = vadd.f32 %v283, %v443
    %445 = vmatmul.f32.gmra.mxu0 %v89
    %v446 = vpop.f32.mrf.mxu0
    %v447 = vadd.f32 %v286, %v446
    %448 = vmatmul.f32.gmra.mxu0 %v91
    %v449 = vpop.f32.mrf.mxu0
    %v450 = vadd.f32 %v289, %v449
    %451 = vmatmul.f32.gmra.mxu0 %v93
    %v452 = vpop.f32.mrf.mxu0
    %v453 = vadd.f32 %v292, %v452
    %454 = vmatmul.f32.gmra.mxu0 %v95
    %v455 = vpop.f32.mrf.mxu0
    %v456 = vadd.f32 %v295, %v455
    %457 = vmatmul.f32.gmra.mxu0 %v97
    %v458 = vpop.f32.mrf.mxu0
    %v459 = vadd.f32 %v298, %v458
    %460 = vmatmul.f32.gmra.mxu0 %v99
    %v461 = vpop.f32.mrf.mxu0
    %v462 = vadd.f32 %v301, %v461
    %463 = vmatmul.f32.gmra.mxu0 %v101
    %v464 = vpop.f32.mrf.mxu0
    %v465 = vadd.f32 %v304, %v464
    %466 = vmatmul.f32.gmra.mxu0 %v103
    %v467 = vpop.f32.mrf.mxu0
    %v468 = vadd.f32 %v307, %v467
    %469 = vmatmul.f32.gmra.mxu0 %v105
    %v470 = vpop.f32.mrf.mxu0
    %v471 = vadd.f32 %v310, %v470
    %472 = vmatmul.f32.gmra.mxu0 %v107
    %v473 = vpop.f32.mrf.mxu0
    %v474 = vadd.f32 %v313, %v473
    %475 = vmatmul.f32.gmra.mxu0 %v109
    %v476 = vpop.f32.mrf.mxu0
    %v477 = vadd.f32 %v316, %v476
    %478 = vmatmul.f32.gmra.mxu0 %v111
    %v479 = vpop.f32.mrf.mxu0
    %v480 = vadd.f32 %v319, %v479
    %481 = vmatmul.f32.gmra.mxu0 %v113
    %v482 = vpop.f32.mrf.mxu0
    %v483 = vadd.f32 %v322, %v482
    %484 = vmatmul.f32.gmra.mxu0 %v115
    %v485 = vpop.f32.mrf.mxu0
    %v486 = vadd.f32 %v325, %v485
    %487 = vmatmul.f32.gmra.mxu0 %v117
    %v488 = vpop.f32.mrf.mxu0
    %v489 = vadd.f32 %v328, %v488
    %490 = vmatmul.f32.gmra.mxu0 %v119
    %v491 = vpop.f32.mrf.mxu0
    %v492 = vadd.f32 %v331, %v491
    %493 = vmatmul.f32.gmra.mxu0 %v121
    %v494 = vpop.f32.mrf.mxu0
    %v495 = vadd.f32 %v334, %v494
    %496 = vmatmul.f32.gmra.mxu0 %v123
    %v497 = vpop.f32.mrf.mxu0
    %v498 = vadd.f32 %v337, %v497
    %499 = vmatmul.f32.gmra.mxu0 %v125
    %v500 = vpop.f32.mrf.mxu0
    %v501 = vadd.f32 %v340, %v500
    %502 = vmatmul.f32.gmra.mxu0 %v127
    %v503 = vpop.f32.mrf.mxu0
    %v504 = vadd.f32 %v343, %v503
    %505 = vmatmul.f32.gmra.mxu0 %v129
    %v506 = vpop.f32.mrf.mxu0
    %v507 = vadd.f32 %v346, %v506
    %508 = vmatmul.f32.gmra.mxu0 %v131
    %v509 = vpop.f32.mrf.mxu0
    %v510 = vadd.f32 %v349, %v509
    %511 = vmatmul.f32.gmra.mxu0 %v133
    %v512 = vpop.f32.mrf.mxu0
    %v513 = vadd.f32 %v352, %v512
    %514 = vmatmul.f32.gmra.mxu0 %v135
    %v515 = vpop.f32.mrf.mxu0
    %v516 = vadd.f32 %v355, %v515
    %517 = vmatmul.f32.gmra.mxu0 %v137
    %v518 = vpop.f32.mrf.mxu0
    %v519 = vadd.f32 %v358, %v518
    %520 = vmatmul.f32.gmra.mxu0 %v139
    %v521 = vpop.f32.mrf.mxu0
    %v522 = vadd.f32 %v361, %v521
    %523 = vmatmul.f32.gmra.mxu0 %v141
    %v524 = vpop.f32.mrf.mxu0
    %v525 = vadd.f32 %v364, %v524
    %526 = vmatmul.f32.gmra.mxu0 %v143
    %v527 = vpop.f32.mrf.mxu0
    %v528 = vadd.f32 %v367, %v527
    %529 = vmatmul.f32.gmra.mxu0 %v145
    %v530 = vpop.f32.mrf.mxu0
    %v531 = vadd.f32 %v370, %v530
    %532 = vmatmul.f32.gmra.mxu0 %v147
    %v533 = vpop.f32.mrf.mxu0
    %v534 = vadd.f32 %v373, %v533
    %535 = vmatmul.f32.gmra.mxu0 %v149
    %v536 = vpop.f32.mrf.mxu0
    %v537 = vadd.f32 %v376, %v536
    %538 = vmatmul.f32.gmra.mxu0 %v151
    %v539 = vpop.f32.mrf.mxu0
    %v540 = vadd.f32 %v379, %v539
    %541 = vmatmul.f32.gmra.mxu0 %v153
    %v542 = vpop.f32.mrf.mxu0
    %v543 = vadd.f32 %v382, %v542
    %544 = vmatmul.f32.gmra.mxu0 %v155
    %v545 = vpop.f32.mrf.mxu0
    %v546 = vadd.f32 %v385, %v545
    %547 = vdwg.mxu0
    %548 = vmatpush.xpose.msra.mxu0 %v218
    %549 = vmatpush.xpose.msra.mxu0 %v216
    %550 = vmatpush.xpose.msra.mxu0 %v214
    %551 = vmatpush.xpose.msra.mxu0 %v212
    %552 = vmatpush.xpose.msra.mxu0 %v210
    %553 = vmatpush.xpose.msra.mxu0 %v208
    %554 = vmatpush.xpose.msra.mxu0 %v206
    %555 = vmatpush.xpose.msra.mxu0 %v204
    %556 = vmatpush.xpose.msra.mxu0 %v202
    %557 = vmatpush.xpose.msra.mxu0 %v200
    %558 = vmatpush.xpose.msra.mxu0 %v198
    %559 = vmatpush.xpose.msra.mxu0 %v196
    %560 = vmatpush.xpose.msra.mxu0 %v194
    %561 = vmatpush.xpose.msra.mxu0 %v192
    %562 = vmatpush.xpose.msra.mxu0 %v190
    %563 = vmatpush.xpose.msra.mxu0 %v188
    %564 = vmatmul.f32.gmra.mxu0 %v60
    %v565 = vpop.f32.mrf.mxu0
    %v566 = vadd.f32 %v223, %v565
    %567 = vmatmul.f32.gmra.mxu0 %v62
    %v568 = vpop.f32.mrf.mxu0
    %v569 = vadd.f32 %v223, %v568
    %570 = vmatmul.f32.gmra.mxu0 %v64
    %v571 = vpop.f32.mrf.mxu0
    %v572 = vadd.f32 %v223, %v571
    %573 = vmatmul.f32.gmra.mxu0 %v66
    %v574 = vpop.f32.mrf.mxu0
    %v575 = vadd.f32 %v223, %v574
    %576 = vmatmul.f32.gmra.mxu0 %v68
    %v577 = vpop.f32.mrf.mxu0
    %v578 = vadd.f32 %v223, %v577
    %579 = vmatmul.f32.gmra.mxu0 %v70
    %v580 = vpop.f32.mrf.mxu0
    %v581 = vadd.f32 %v223, %v580
    %582 = vmatmul.f32.gmra.mxu0 %v72
    %v583 = vpop.f32.mrf.mxu0
    %v584 = vadd.f32 %v223, %v583
    %585 = vmatmul.f32.gmra.mxu0 %v74
    %v586 = vpop.f32.mrf.mxu0
    %v587 = vadd.f32 %v223, %v586
    %588 = vmatmul.f32.gmra.mxu0 %v76
    %v589 = vpop.f32.mrf.mxu0
    %v590 = vadd.f32 %v223, %v589
    %591 = vmatmul.f32.gmra.mxu0 %v78
    %v592 = vpop.f32.mrf.mxu0
    %v593 = vadd.f32 %v223, %v592
    %594 = vmatmul.f32.gmra.mxu0 %v80
    %v595 = vpop.f32.mrf.mxu0
    %v596 = vadd.f32 %v223, %v595
    %597 = vmatmul.f32.gmra.mxu0 %v82
    %v598 = vpop.f32.mrf.mxu0
    %v599 = vadd.f32 %v223, %v598
    %600 = vmatmul.f32.gmra.mxu0 %v84
    %v601 = vpop.f32.mrf.mxu0
    %v602 = vadd.f32 %v223, %v601
    %603 = vmatmul.f32.gmra.mxu0 %v86
    %v604 = vpop.f32.mrf.mxu0
    %v605 = vadd.f32 %v223, %v604
    %606 = vmatmul.f32.gmra.mxu0 %v88
    %v607 = vpop.f32.mrf.mxu0
    %v608 = vadd.f32 %v223, %v607
    %609 = vmatmul.f32.gmra.mxu0 %v90
    %v610 = vpop.f32.mrf.mxu0
    %v611 = vadd.f32 %v223, %v610
    %612 = vmatmul.f32.gmra.mxu0 %v92
    %v613 = vpop.f32.mrf.mxu0
    %v614 = vadd.f32 %v223, %v613
    %615 = vmatmul.f32.gmra.mxu0 %v94
    %v616 = vpop.f32.mrf.mxu0
    %v617 = vadd.f32 %v223, %v616
    %618 = vmatmul.f32.gmra.mxu0 %v96
    %v619 = vpop.f32.mrf.mxu0
    %v620 = vadd.f32 %v223, %v619
    %621 = vmatmul.f32.gmra.mxu0 %v98
    %v622 = vpop.f32.mrf.mxu0
    %v623 = vadd.f32 %v223, %v622
    %624 = vmatmul.f32.gmra.mxu0 %v100
    %v625 = vpop.f32.mrf.mxu0
    %v626 = vadd.f32 %v223, %v625
    %627 = vmatmul.f32.gmra.mxu0 %v102
    %v628 = vpop.f32.mrf.mxu0
    %v629 = vadd.f32 %v223, %v628
    %630 = vmatmul.f32.gmra.mxu0 %v104
    %v631 = vpop.f32.mrf.mxu0
    %v632 = vadd.f32 %v223, %v631
    %633 = vmatmul.f32.gmra.mxu0 %v106
    %v634 = vpop.f32.mrf.mxu0
    %v635 = vadd.f32 %v223, %v634
    %636 = vmatmul.f32.gmra.mxu0 %v108
    %v637 = vpop.f32.mrf.mxu0
    %v638 = vadd.f32 %v223, %v637
    %639 = vmatmul.f32.gmra.mxu0 %v110
    %v640 = vpop.f32.mrf.mxu0
    %v641 = vadd.f32 %v223, %v640
    %642 = vmatmul.f32.gmra.mxu0 %v112
    %v643 = vpop.f32.mrf.mxu0
    %v644 = vadd.f32 %v223, %v643
    %645 = vmatmul.f32.gmra.mxu0 %v114
    %v646 = vpop.f32.mrf.mxu0
    %v647 = vadd.f32 %v223, %v646
    %648 = vmatmul.f32.gmra.mxu0 %v116
    %v649 = vpop.f32.mrf.mxu0
    %v650 = vadd.f32 %v223, %v649
    %651 = vmatmul.f32.gmra.mxu0 %v118
    %v652 = vpop.f32.mrf.mxu0
    %v653 = vadd.f32 %v223, %v652
    %654 = vmatmul.f32.gmra.mxu0 %v120
    %v655 = vpop.f32.mrf.mxu0
    %v656 = vadd.f32 %v223, %v655
    %657 = vmatmul.f32.gmra.mxu0 %v122
    %v658 = vpop.f32.mrf.mxu0
    %v659 = vadd.f32 %v223, %v658
    %660 = vmatmul.f32.gmra.mxu0 %v124
    %v661 = vpop.f32.mrf.mxu0
    %v662 = vadd.f32 %v223, %v661
    %663 = vmatmul.f32.gmra.mxu0 %v126
    %v664 = vpop.f32.mrf.mxu0
    %v665 = vadd.f32 %v223, %v664
    %666 = vmatmul.f32.gmra.mxu0 %v128
    %v667 = vpop.f32.mrf.mxu0
    %v668 = vadd.f32 %v223, %v667
    %669 = vmatmul.f32.gmra.mxu0 %v130
    %v670 = vpop.f32.mrf.mxu0
    %v671 = vadd.f32 %v223, %v670
    %672 = vmatmul.f32.gmra.mxu0 %v132
    %v673 = vpop.f32.mrf.mxu0
    %v674 = vadd.f32 %v223, %v673
    %675 = vmatmul.f32.gmra.mxu0 %v134
    %v676 = vpop.f32.mrf.mxu0
    %v677 = vadd.f32 %v223, %v676
    %678 = vmatmul.f32.gmra.mxu0 %v136
    %v679 = vpop.f32.mrf.mxu0
    %v680 = vadd.f32 %v223, %v679
    %681 = vmatmul.f32.gmra.mxu0 %v138
    %v682 = vpop.f32.mrf.mxu0
    %v683 = vadd.f32 %v223, %v682
    %684 = vmatmul.f32.gmra.mxu0 %v140
    %v685 = vpop.f32.mrf.mxu0
    %v686 = vadd.f32 %v223, %v685
    %687 = vmatmul.f32.gmra.mxu0 %v142
    %v688 = vpop.f32.mrf.mxu0
    %v689 = vadd.f32 %v223, %v688
    %690 = vmatmul.f32.gmra.mxu0 %v144
    %v691 = vpop.f32.mrf.mxu0
    %v692 = vadd.f32 %v223, %v691
    %693 = vmatmul.f32.gmra.mxu0 %v146
    %v694 = vpop.f32.mrf.mxu0
    %v695 = vadd.f32 %v223, %v694
    %696 = vmatmul.f32.gmra.mxu0 %v148
    %v697 = vpop.f32.mrf.mxu0
    %v698 = vadd.f32 %v223, %v697
    %699 = vmatmul.f32.gmra.mxu0 %v150
    %v700 = vpop.f32.mrf.mxu0
    %v701 = vadd.f32 %v223, %v700
    %702 = vmatmul.f32.gmra.mxu0 %v152
    %v703 = vpop.f32.mrf.mxu0
    %v704 = vadd.f32 %v223, %v703
    %705 = vmatmul.f32.gmra.mxu0 %v154
    %v706 = vpop.f32.mrf.mxu0
    %v707 = vadd.f32 %v223, %v706
    %708 = vdwg.mxu0
    %709 = vmatpush.xpose.msra.mxu0 %v219
    %710 = vmatpush.xpose.msra.mxu0 %v217
    %711 = vmatpush.xpose.msra.mxu0 %v215
    %712 = vmatpush.xpose.msra.mxu0 %v213
    %713 = vmatpush.xpose.msra.mxu0 %v211
    %714 = vmatpush.xpose.msra.mxu0 %v209
    %715 = vmatpush.xpose.msra.mxu0 %v207
    %716 = vmatpush.xpose.msra.mxu0 %v205
    %717 = vmatpush.xpose.msra.mxu0 %v203
    %718 = vmatpush.xpose.msra.mxu0 %v201
    %719 = vmatpush.xpose.msra.mxu0 %v199
    %720 = vmatpush.xpose.msra.mxu0 %v197
    %721 = vmatpush.xpose.msra.mxu0 %v195
    %722 = vmatpush.xpose.msra.mxu0 %v193
    %723 = vmatpush.xpose.msra.mxu0 %v191
    %724 = vmatpush.xpose.msra.mxu0 %v189
    %725 = vmatmul.f32.gmra.mxu0 %v61
    %v726 = vpop.f32.mrf.mxu0
    %v727 = vadd.f32 %v566, %v726
    %728 = vmatmul.f32.gmra.mxu0 %v63
    %v729 = vpop.f32.mrf.mxu0
    %v730 = vadd.f32 %v569, %v729
    %731 = vmatmul.f32.gmra.mxu0 %v65
    %v732 = vpop.f32.mrf.mxu0
    %v733 = vadd.f32 %v572, %v732
    %734 = vmatmul.f32.gmra.mxu0 %v67
    %v735 = vpop.f32.mrf.mxu0
    %v736 = vadd.f32 %v575, %v735
    %737 = vmatmul.f32.gmra.mxu0 %v69
    %v738 = vpop.f32.mrf.mxu0
    %v739 = vadd.f32 %v578, %v738
    %740 = vmatmul.f32.gmra.mxu0 %v71
    %v741 = vpop.f32.mrf.mxu0
    %v742 = vadd.f32 %v581, %v741
    %743 = vmatmul.f32.gmra.mxu0 %v73
    %v744 = vpop.f32.mrf.mxu0
    %v745 = vadd.f32 %v584, %v744
    %746 = vmatmul.f32.gmra.mxu0 %v75
    %v747 = vpop.f32.mrf.mxu0
    %v748 = vadd.f32 %v587, %v747
    %749 = vmatmul.f32.gmra.mxu0 %v77
    %v750 = vpop.f32.mrf.mxu0
    %v751 = vadd.f32 %v590, %v750
    %752 = vmatmul.f32.gmra.mxu0 %v79
    %v753 = vpop.f32.mrf.mxu0
    %v754 = vadd.f32 %v593, %v753
    %755 = vmatmul.f32.gmra.mxu0 %v81
    %v756 = vpop.f32.mrf.mxu0
    %v757 = vadd.f32 %v596, %v756
    %758 = vmatmul.f32.gmra.mxu0 %v83
    %v759 = vpop.f32.mrf.mxu0
    %v760 = vadd.f32 %v599, %v759
    %761 = vmatmul.f32.gmra.mxu0 %v85
    %v762 = vpop.f32.mrf.mxu0
    %v763 = vadd.f32 %v602, %v762
    %764 = vmatmul.f32.gmra.mxu0 %v87
    %v765 = vpop.f32.mrf.mxu0
    %v766 = vadd.f32 %v605, %v765
    %767 = vmatmul.f32.gmra.mxu0 %v89
    %v768 = vpop.f32.mrf.mxu0
    %v769 = vadd.f32 %v608, %v768
    %770 = vmatmul.f32.gmra.mxu0 %v91
    %v771 = vpop.f32.mrf.mxu0
    %v772 = vadd.f32 %v611, %v771
    %773 = vmatmul.f32.gmra.mxu0 %v93
    %v774 = vpop.f32.mrf.mxu0
    %v775 = vadd.f32 %v614, %v774
    %776 = vmatmul.f32.gmra.mxu0 %v95
    %v777 = vpop.f32.mrf.mxu0
    %v778 = vadd.f32 %v617, %v777
    %779 = vmatmul.f32.gmra.mxu0 %v97
    %v780 = vpop.f32.mrf.mxu0
    %v781 = vadd.f32 %v620, %v780
    %782 = vmatmul.f32.gmra.mxu0 %v99
    %v783 = vpop.f32.mrf.mxu0
    %v784 = vadd.f32 %v623, %v783
    %785 = vmatmul.f32.gmra.mxu0 %v101
    %v786 = vpop.f32.mrf.mxu0
    %v787 = vadd.f32 %v626, %v786
    %788 = vmatmul.f32.gmra.mxu0 %v103
    %v789 = vpop.f32.mrf.mxu0
    %v790 = vadd.f32 %v629, %v789
    %791 = vmatmul.f32.gmra.mxu0 %v105
    %v792 = vpop.f32.mrf.mxu0
    %v793 = vadd.f32 %v632, %v792
    %794 = vmatmul.f32.gmra.mxu0 %v107
    %v795 = vpop.f32.mrf.mxu0
    %v796 = vadd.f32 %v635, %v795
    %797 = vmatmul.f32.gmra.mxu0 %v109
    %v798 = vpop.f32.mrf.mxu0
    %v799 = vadd.f32 %v638, %v798
    %800 = vmatmul.f32.gmra.mxu0 %v111
    %v801 = vpop.f32.mrf.mxu0
    %v802 = vadd.f32 %v641, %v801
    %803 = vmatmul.f32.gmra.mxu0 %v113
    %v804 = vpop.f32.mrf.mxu0
    %v805 = vadd.f32 %v644, %v804
    %806 = vmatmul.f32.gmra.mxu0 %v115
    %v807 = vpop.f32.mrf.mxu0
    %v808 = vadd.f32 %v647, %v807
    %809 = vmatmul.f32.gmra.mxu0 %v117
    %v810 = vpop.f32.mrf.mxu0
    %v811 = vadd.f32 %v650, %v810
    %812 = vmatmul.f32.gmra.mxu0 %v119
    %v813 = vpop.f32.mrf.mxu0
    %v814 = vadd.f32 %v653, %v813
    %815 = vmatmul.f32.gmra.mxu0 %v121
    %v816 = vpop.f32.mrf.mxu0
    %v817 = vadd.f32 %v656, %v816
    %818 = vmatmul.f32.gmra.mxu0 %v123
    %v819 = vpop.f32.mrf.mxu0
    %v820 = vadd.f32 %v659, %v819
    %821 = vmatmul.f32.gmra.mxu0 %v125
    %v822 = vpop.f32.mrf.mxu0
    %v823 = vadd.f32 %v662, %v822
    %824 = vmatmul.f32.gmra.mxu0 %v127
    %v825 = vpop.f32.mrf.mxu0
    %v826 = vadd.f32 %v665, %v825
    %827 = vmatmul.f32.gmra.mxu0 %v129
    %v828 = vpop.f32.mrf.mxu0
    %v829 = vadd.f32 %v668, %v828
    %830 = vmatmul.f32.gmra.mxu0 %v131
    %v831 = vpop.f32.mrf.mxu0
    %v832 = vadd.f32 %v671, %v831
    %833 = vmatmul.f32.gmra.mxu0 %v133
    %v834 = vpop.f32.mrf.mxu0
    %v835 = vadd.f32 %v674, %v834
    %836 = vmatmul.f32.gmra.mxu0 %v135
    %v837 = vpop.f32.mrf.mxu0
    %v838 = vadd.f32 %v677, %v837
    %839 = vmatmul.f32.gmra.mxu0 %v137
    %v840 = vpop.f32.mrf.mxu0
    %v841 = vadd.f32 %v680, %v840
    %842 = vmatmul.f32.gmra.mxu0 %v139
    %v843 = vpop.f32.mrf.mxu0
    %v844 = vadd.f32 %v683, %v843
    %845 = vmatmul.f32.gmra.mxu0 %v141
    %v846 = vpop.f32.mrf.mxu0
    %v847 = vadd.f32 %v686, %v846
    %848 = vmatmul.f32.gmra.mxu0 %v143
    %v849 = vpop.f32.mrf.mxu0
    %v850 = vadd.f32 %v689, %v849
    %851 = vmatmul.f32.gmra.mxu0 %v145
    %v852 = vpop.f32.mrf.mxu0
    %v853 = vadd.f32 %v692, %v852
    %854 = vmatmul.f32.gmra.mxu0 %v147
    %v855 = vpop.f32.mrf.mxu0
    %v856 = vadd.f32 %v695, %v855
    %857 = vmatmul.f32.gmra.mxu0 %v149
    %v858 = vpop.f32.mrf.mxu0
    %v859 = vadd.f32 %v698, %v858
    %860 = vmatmul.f32.gmra.mxu0 %v151
    %v861 = vpop.f32.mrf.mxu0
    %v862 = vadd.f32 %v701, %v861
    %863 = vmatmul.f32.gmra.mxu0 %v153
    %v864 = vpop.f32.mrf.mxu0
    %v865 = vadd.f32 %v704, %v864
    %866 = vmatmul.f32.gmra.mxu0 %v155
    %v867 = vpop.f32.mrf.mxu0
    %v868 = vadd.f32 %v707, %v867
    %869 = vdwg.mxu0
    %870 = vst [vmem:[#allocation8] sm:$0xff] %v405
    %871 = vst [vmem:[#allocation8 + $0x8] sm:$0xff] %v727
    %872 = vst [vmem:[#allocation8 + $0x10] sm:$0xff] %v408
    %873 = vst [vmem:[#allocation8 + $0x18] sm:$0xff] %v730
    %874 = vst [vmem:[#allocation8 + $0x20] sm:$0xff] %v411
    %875 = vst [vmem:[#allocation8 + $0x28] sm:$0xff] %v733
    %876 = vst [vmem:[#allocation8 + $0x30] sm:$0xff] %v414
    %877 = vst [vmem:[#allocation8 + $0x38] sm:$0xff] %v736
    %878 = vst [vmem:[#allocation8 + $0x40] sm:$0xff] %v417
    %879 = vst [vmem:[#allocation8 + $0x48] sm:$0xff] %v739
    %880 = vst [vmem:[#allocation8 + $0x50] sm:$0xff] %v420
    %881 = vst [vmem:[#allocation8 + $0x58] sm:$0xff] %v742
    %882 = vst [vmem:[#allocation8 + $0x60] sm:$0xff] %v423
    %883 = vst [vmem:[#allocation8 + $0x68] sm:$0xff] %v745
    %884 = vst [vmem:[#allocation8 + $0x70] sm:$0xff] %v426
    %885 = vst [vmem:[#allocation8 + $0x78] sm:$0xff] %v748
    %886 = vst [vmem:[#allocation8 + $0x80] sm:$0xff] %v429
    %887 = vst [vmem:[#allocation8 + $0x88] sm:$0xff] %v751
    %888 = vst [vmem:[#allocation8 + $0x90] sm:$0xff] %v432
    %889 = vst [vmem:[#allocation8 + $0x98] sm:$0xff] %v754
    %890 = vst [vmem:[#allocation8 + $0xa0] sm:$0xff] %v435
    %891 = vst [vmem:[#allocation8 + $0xa8] sm:$0xff] %v757
    %892 = vst [vmem:[#allocation8 + $0xb0] sm:$0xff] %v438
    %893 = vst [vmem:[#allocation8 + $0xb8] sm:$0xff] %v760
    %894 = vst [vmem:[#allocation8 + $0xc0] sm:$0xff] %v441
    %895 = vst [vmem:[#allocation8 + $0xc8] sm:$0xff] %v763
    %896 = vst [vmem:[#allocation8 + $0xd0] sm:$0xff] %v444
    %897 = vst [vmem:[#allocation8 + $0xd8] sm:$0xff] %v766
    %898 = vst [vmem:[#allocation8 + $0xe0] sm:$0xff] %v447
    %899 = vst [vmem:[#allocation8 + $0xe8] sm:$0xff] %v769
    %900 = vst [vmem:[#allocation8 + $0xf0] sm:$0xff] %v450
    %901 = vst [vmem:[#allocation8 + $0xf8] sm:$0xff] %v772
    %902 = vst [vmem:[#allocation8 + $0x100] sm:$0xff] %v453
    %903 = vst [vmem:[#allocation8 + $0x108] sm:$0xff] %v775
    %904 = vst [vmem:[#allocation8 + $0x110] sm:$0xff] %v456
    %905 = vst [vmem:[#allocation8 + $0x118] sm:$0xff] %v778
    %906 = vst [vmem:[#allocation8 + $0x120] sm:$0xff] %v459
    %907 = vst [vmem:[#allocation8 + $0x128] sm:$0xff] %v781
    %908 = vst [vmem:[#allocation8 + $0x130] sm:$0xff] %v462
    %909 = vst [vmem:[#allocation8 + $0x138] sm:$0xff] %v784
    %910 = vst [vmem:[#allocation8 + $0x140] sm:$0xff] %v465
    %911 = vst [vmem:[#allocation8 + $0x148] sm:$0xff] %v787
    %912 = vst [vmem:[#allocation8 + $0x150] sm:$0xff] %v468
    %913 = vst [vmem:[#allocation8 + $0x158] sm:$0xff] %v790
    %914 = vst [vmem:[#allocation8 + $0x160] sm:$0xff] %v471
    %915 = vst [vmem:[#allocation8 + $0x168] sm:$0xff] %v793
    %916 = vst [vmem:[#allocation8 + $0x170] sm:$0xff] %v474
    %917 = vst [vmem:[#allocation8 + $0x178] sm:$0xff] %v796
    %918 = vst [vmem:[#allocation8 + $0x180] sm:$0xff] %v477
    %919 = vst [vmem:[#allocation8 + $0x188] sm:$0xff] %v799
    %920 = vst [vmem:[#allocation8 + $0x190] sm:$0xff] %v480
    %921 = vst [vmem:[#allocation8 + $0x198] sm:$0xff] %v802
    %922 = vst [vmem:[#allocation8 + $0x1a0] sm:$0xff] %v483
    %923 = vst [vmem:[#allocation8 + $0x1a8] sm:$0xff] %v805
    %924 = vst [vmem:[#allocation8 + $0x1b0] sm:$0xff] %v486
    %925 = vst [vmem:[#allocation8 + $0x1b8] sm:$0xff] %v808
    %926 = vst [vmem:[#allocation8 + $0x1c0] sm:$0xff] %v489
    %927 = vst [vmem:[#allocation8 + $0x1c8] sm:$0xff] %v811
    %928 = vst [vmem:[#allocation8 + $0x1d0] sm:$0xff] %v492
    %929 = vst [vmem:[#allocation8 + $0x1d8] sm:$0xff] %v814
    %930 = vst [vmem:[#allocation8 + $0x1e0] sm:$0xff] %v495
    %931 = vst [vmem:[#allocation8 + $0x1e8] sm:$0xff] %v817
    %932 = vst [vmem:[#allocation8 + $0x1f0] sm:$0xff] %v498
    %933 = vst [vmem:[#allocation8 + $0x1f8] sm:$0xff] %v820
    %934 = vst [vmem:[#allocation8 + $0x200] sm:$0xff] %v501
    %935 = vst [vmem:[#allocation8 + $0x208] sm:$0xff] %v823
    %936 = vst [vmem:[#allocation8 + $0x210] sm:$0xff] %v504
    %937 = vst [vmem:[#allocation8 + $0x218] sm:$0xff] %v826
    %938 = vst [vmem:[#allocation8 + $0x220] sm:$0xff] %v507
    %939 = vst [vmem:[#allocation8 + $0x228] sm:$0xff] %v829
    %940 = vst [vmem:[#allocation8 + $0x230] sm:$0xff] %v510
    %941 = vst [vmem:[#allocation8 + $0x238] sm:$0xff] %v832
    %942 = vst [vmem:[#allocation8 + $0x240] sm:$0xff] %v513
    %943 = vst [vmem:[#allocation8 + $0x248] sm:$0xff] %v835
    %944 = vst [vmem:[#allocation8 + $0x250] sm:$0xff] %v516
    %945 = vst [vmem:[#allocation8 + $0x258] sm:$0xff] %v838
    %946 = vst [vmem:[#allocation8 + $0x260] sm:$0xff] %v519
    %947 = vst [vmem:[#allocation8 + $0x268] sm:$0xff] %v841
    %948 = vst [vmem:[#allocation8 + $0x270] sm:$0xff] %v522
    %949 = vst [vmem:[#allocation8 + $0x278] sm:$0xff] %v844
    %950 = vst [vmem:[#allocation8 + $0x280] sm:$0xff] %v525
    %951 = vst [vmem:[#allocation8 + $0x288] sm:$0xff] %v847
    %952 = vst [vmem:[#allocation8 + $0x290] sm:$0xff] %v528
    %953 = vst [vmem:[#allocation8 + $0x298] sm:$0xff] %v850
    %954 = vst [vmem:[#allocation8 + $0x2a0] sm:$0xff] %v531
    %955 = vst [vmem:[#allocation8 + $0x2a8] sm:$0xff] %v853
    %956 = vst [vmem:[#allocation8 + $0x2b0] sm:$0xff] %v534
    %957 = vst [vmem:[#allocation8 + $0x2b8] sm:$0xff] %v856
    %958 = vst [vmem:[#allocation8 + $0x2c0] sm:$0xff] %v537
    %959 = vst [vmem:[#allocation8 + $0x2c8] sm:$0xff] %v859
    %960 = vst [vmem:[#allocation8 + $0x2d0] sm:$0xff] %v540
    %961 = vst [vmem:[#allocation8 + $0x2d8] sm:$0xff] %v862
    %962 = vst [vmem:[#allocation8 + $0x2e0] sm:$0xff] %v543
    %963 = vst [vmem:[#allocation8 + $0x2e8] sm:$0xff] %v865
    %964 = vst [vmem:[#allocation8 + $0x2f0] sm:$0xff] %v546
    %965 = vst [vmem:[#allocation8 + $0x2f8] sm:$0xff] %v868
    // Predicated region
    $region26: #{tpu_custom_call.1} parent=1 // pred_check
      _
    $region27: #{tpu_custom_call.1} parent=1 // pred_check_branch
      %967 = sbr.rel (0) target = $region29
    $region28: #{tpu_custom_call.1} parent=1 // pred_region
      %969 = vsyncadd [#allocation4], 0
      %s970 = sshll.u32 [#allocation8], 4
      %s971 = int_to_ptr.vmem [resolvable:$true] %s970
      %s972 = sshll.u32 %s3, 4
      %s973 = int_to_ptr.hbm [resolvable:$true] %s972
      %978 = dma.vmem_to_hbm [thread:$0]  %s971, 12288, %s973, [#allocation4], 256, 256, 16
    $region29: #{tpu_custom_call.1} parent=1 // pred_fallthru
      _
    // Predicated region
    $region30: #{tpu_custom_call.1} parent=1 // pred_check
      _
    $region31: #{tpu_custom_call.1} parent=1 // pred_check_branch
      %980 = sbr.rel (0) target = $region33
    $region32: #{tpu_custom_call.1} parent=1 // pred_region
      %982 = dma.done [#allocation4], 12288
    $region33: #{tpu_custom_call.1} parent=1 // pred_fallthru
      _
    %983 = vsyncpa [#allocation3], 1
    %984 = vsyncpa [#allocation6], 1
    %985 = vsyncpa [#allocation4], 1

</llo_original>
